<compile_context>
chip_gen: v7x
topology: tpu7x:2x2x1
jax: 0.10.0
libtpu: 0.0.40
codegen_flags: <defaults>
</compile_context>

<pallas_src>
import math
from types import SimpleNamespace

import jax
import jax.numpy as jnp
from jax.experimental import pallas as pl
from jax.experimental.pallas import tpu as pltpu

_LANE = 128
_TARGET_BLOCK_BYTES = 3 * 512 * 1024      # ~1.5 MiB per stream per grid step
_VMEM_LIMIT_BYTES = 40 * 1024 * 1024      # 8 streams x 2 bufs x 1.5 MiB = 24 MiB + slack
_EPS = 1e-12                              # torch.nn.functional.normalize default eps
_FORCE_SPLIT = None                       # test hook: override the TensorCore split


def _cdiv(a, b):
    return -(-a // b)


def _round_up(x, m):
    return _cdiv(x, m) * m


def _sublane(dtype):
    itemsize = jnp.dtype(dtype).itemsize
    return max(8, 32 // max(int(itemsize), 1))


def _num_splits():
    """2 on v7x (two TensorCores per chip, sharded via a 'parallel' grid axis), else 1."""
    if _FORCE_SPLIT is not None:
        return int(_FORCE_SPLIT)
    try:
        kind = jax.devices()[0].device_kind.lower()
    except Exception:
        return 1
    return 2 if "v7" in kind else 1


# --------------------------------------------------------------------- in-kernel helpers

def _cos_tile(p_ref, z_ref, valid):
    """Per-row cosine contributions (p.z)/(max(|p|,eps)*max(|z|,eps)) summed over the tile.
    `valid` (static int or None) masks out-of-bounds tail rows (garbage -> 0 via select)."""
    p = p_ref[...].astype(jnp.float32)
    z = z_ref[...].astype(jnp.float32)
    pz = jnp.sum(p * z, axis=1, keepdims=True)
    pp = jnp.sum(p * p, axis=1, keepdims=True)
    zz = jnp.sum(z * z, axis=1, keepdims=True)
    inv = 1.0 / (jnp.maximum(jnp.sqrt(pp), _EPS) * jnp.maximum(jnp.sqrt(zz), _EPS))
    dots = pz * inv                                        # (tile_rows, 1)
    if valid is not None:
        ridx = jax.lax.broadcasted_iota(jnp.int32, dots.shape, 0)
        dots = jnp.where(ridx < valid, dots, 0.0)          # select, NaN/Inf-safe
    return jnp.sum(dots)                                   # scalar


def _sq_tile(a_ref, b_ref, valid):
    """Per-lane partial sums of (a-b)^2 over the tile rows: returns (1, W)."""
    a = a_ref[...].astype(jnp.float32)
    b = b_ref[...].astype(jnp.float32)
    d = a - b
    sq = d * d                                             # (tile_rows, W)
    if valid is not None:
        ridx = jax.lax.broadcasted_iota(jnp.int32, sq.shape, 0)
        sq = jnp.where(ridx < valid, sq, 0.0)              # select, NaN/Inf-safe
    return jnp.sum(sq, axis=0, keepdims=True)              # (1, W) lane partials


def _fam_accumulate(fam, acc, refs, g, total):
    """Accumulate this family's contribution for global step g into its accumulator."""
    t_f = fam["n_tiles"]
    tr = fam["tile_rows"]
    rows = fam["rows"]
    tail = rows - (t_f - 1) * tr                           # valid rows in the last tile
    tile_fn = _cos_tile if fam["kind"] == "cos" else _sq_tile

    def do(valid):
        s = None
        for j in range(0, len(refs), 2):
            t = tile_fn(refs[j], refs[j + 1], valid)
            s = t if s is None else s + t
        acc[...] += s

    if t_f == total and tail == tr:
        do(None)                                           # every grid step is a full tile
    elif tail == tr:
        @pl.when(g < t_f)                                  # family exhausted early (rare)
        def _():
            do(None)
    else:
        @pl.when(g < t_f - 1)
        def _():
            do(None)

        @pl.when(g == t_f - 1)                             # ragged tail: mask OOB rows
        def _():
            do(tail)


# --------------------------------------------------------------------- fused pallas call

def _fused_losses(families, finalize, num_outputs):
    """families: list of dicts {kind:'cos'|'mse', pairs:[(x,y),...]} (2D arrays, no pads).
       finalize: LINEAR fn(list of per-family scalar sums) -> list (<=8) of scalars.
       Returns a (num_outputs,) float32 vector."""
    n_split = _num_splits()

    # -------- per-family geometry (dtype aware, no padding, rebalanced tiles) --------
    steps = 1
    for fam in families:
        x0 = fam["pairs"][0][0]
        rows, width = x0.shape
        fam["rows"], fam["width"] = rows, width
        fam["row_bytes"] = width * int(jnp.dtype(x0.dtype).itemsize)
        fam["sub"] = _sublane(x0.dtype)
        steps = max(steps, _cdiv(rows * fam["row_bytes"], _TARGET_BLOCK_BYTES))

    inner_n = max(1, _cdiv(steps, n_split))
    total = n_split * inner_n

    inputs, in_specs, scratch = [], [], []
    for fam in families:
        rows, width = fam["rows"], fam["width"]
        tr = _round_up(_cdiv(rows, total), fam["sub"])
        if tr >= rows:
            tr = rows                       # single full block (always layout-legal)
        fam["tile_rows"] = tr
        fam["n_tiles"] = _cdiv(rows, tr)

        def make_idx(nt=fam["n_tiles"]):
            def idx(c, i):                  # clamp -> no re-DMA once a family is exhausted
                return (jnp.minimum(c * inner_n + i, nt - 1), 0)
            return idx

        # (pipeline_mode=pl.Buffered(3) is a further sweep knob if DMA jitter shows up.)
        spec = pl.BlockSpec((tr, width), make_idx())
        for x, y in fam["pairs"]:
            inputs += [x, y]
            in_specs += [spec, spec]

        if fam["kind"] == "cos":
            scratch.append(pltpu.VMEM((1, 1), jnp.float32))
        else:
            scratch.append(pltpu.VMEM((1, width), jnp.float32))   # per-lane partials

    n_in = len(inputs)

    def kernel(*refs):
        in_refs = refs[:n_in]
        o_ref = refs[n_in]
        accs = refs[n_in + 1:]
        c = pl.program_id(0)                # TensorCore split ("parallel")
        i = pl.program_id(1)                # streaming reduction ("arbitrary")
        g = c * inner_n + i                 # global step

        @pl.when(i == 0)
        def _():
            for acc in accs:
                acc[...] = jnp.zeros_like(acc)

        off = 0
        for fi, fam in enumerate(families):
            k = 2 * len(fam["pairs"])
            _fam_accumulate(fam, accs[fi], in_refs[off:off + k], g, total)
            off += k

        @pl.when(i == inner_n - 1)
        def _():
            sums = [jnp.sum(acc[...]) for acc in accs]     # one cross-lane reduce each
            outs = finalize(sums)                          # linear in the sums
            row = jax.lax.broadcasted_iota(jnp.int32, (8, _LANE), 0)
            packed = jnp.zeros((8, _LANE), jnp.float32)
            for r, v in enumerate(outs):
                packed = jnp.where(row == r, v, packed)
            o_ref[...] = packed                            # lane-dense packed store

    bytes_accessed = sum(f["rows"] * f["row_bytes"] * 2 * len(f["pairs"]) for f in families)
    bytes_accessed += 8 * _LANE * 4 * n_split
    flops = sum(f["rows"] * f["width"] * len(f["pairs"]) * (6 if f["kind"] == "cos" else 3)
                for f in families)

    out = pl.pallas_call(
        kernel,
        out_shape=jax.ShapeDtypeStruct((8 * n_split, _LANE), jnp.float32),
        grid_spec=pltpu.PrefetchScalarGridSpec(
            num_scalar_prefetch=0,
            grid=(n_split, inner_n),
            in_specs=in_specs,
            out_specs=pl.BlockSpec((8, _LANE), lambda c, i: (c, 0)),
            scratch_shapes=scratch,
        ),
        compiler_params=pltpu.CompilerParams(
            dimension_semantics=("parallel", "arbitrary"),
            vmem_limit_bytes=_VMEM_LIMIT_BYTES),
        cost_estimate=pl.CostEstimate(flops=int(flops), transcendentals=0,
                                      bytes_accessed=int(bytes_accessed)),
    )(*inputs)

    # Per-core packed rows; finalize is linear so summing per-core partials is exact.
    packed = out.reshape(n_split, 8, _LANE).sum(axis=0)
    return packed[:num_outputs, 0]


# --------------------------------------------------------------------- wrapper-side prep

def _prep_cos_family(pairs):
    """(p, z) pairs, each (N, D); feature axis stays on lanes; no copies, no padding."""
    return {"kind": "cos",
            "pairs": [(jnp.asarray(p), jnp.asarray(z)) for p, z in pairs]}


def _prep_mse_family(pairs):
    """Same-shape tensor pairs, flattened lane-dense to (rows, 128) via a free reshape when
    possible, else (prod(leading), last_dim).  No padding; ragged tails masked in-kernel."""
    shape = pairs[0][0].shape
    n_elem = math.prod(shape)
    w = _LANE if n_elem % _LANE == 0 else shape[-1]
    prepped = [(jnp.asarray(a).reshape(-1, w), jnp.asarray(b).reshape(-1, w))
               for a, b in pairs]
    return {"kind": "mse", "pairs": prepped}, n_elem


# ---------------------------------------------------------------------------- the module

class SimSiamLoss:
    def __init__(self, args):
        self.beta = args.beta
        self.vq_loss_weight = args.vq_loss_weight
        self.args = args
        self.ver = "original"
        self.use_recon = args.use_recon

    def forward(self, outs):
        beta = float(self.beta)
        w = float(self.vq_loss_weight)

        if self.use_recon:
            img1, img2 = outs["im_aug1"], outs["im_aug2"]
            recon1, recon2 = outs["recon1"], outs["recon2"]
            vq_fam, n_e = _prep_mse_family([(outs["embeddings1"], outs["encoded1"]),
                                            (outs["embeddings2"], outs["encoded2"])])
            rec_fam, n_img = _prep_mse_family([(img1, recon1), (img2, recon2)])

            def finalize(sums):
                vq_sum, rec_sum = sums
                recon_loss = (0.5 / n_img) * rec_sum
                # codebook + beta*commitment; identical forward values -> computed once
                vq_loss = (0.5 * (1.0 + beta) / n_e) * vq_sum
                loss = recon_loss + w * vq_loss
                return [loss, recon_loss, vq_loss]

            packed = _fused_losses([vq_fam, rec_fam], finalize, 3)
            loss, recon_loss, vq_loss = packed[0], packed[1], packed[2]

            # TODO(synk): fuse the per-channel de-normalization into the same pallas_call
            # (extra NCHW-tiled outputs) to avoid a second HBM read of the image tensors.
            mean = jnp.asarray((0.4914, 0.4822, 0.4465), jnp.float32)[:, None, None]
            std = jnp.asarray((0.2023, 0.1994, 0.201), jnp.float32)[:, None, None]
            img1 = img1 * std + mean
            img2 = img2 * std + mean
            recon1 = recon1 * std + mean
            recon2 = recon2 * std + mean
            return loss, {"siamese_loss": recon_loss, "vq_loss": vq_loss,
                          "img1": img1, "recon1": recon1, "img2": img2, "recon2": recon2}
        else:
            p1, p2, z1, z2 = (outs[k] for k in ("p1", "p2", "z1", "z2"))
            n = p1.shape[0]
            cos_fam = _prep_cos_family([(p1, jax.lax.stop_gradient(z2)),
                                        (p2, jax.lax.stop_gradient(z1))])
            vq_fam, n_e = _prep_mse_family([(outs["embeddings1"], outs["encoded1"]),
                                            (outs["embeddings2"], outs["encoded2"])])

            def finalize(sums):
                cos_sum, vq_sum = sums
                siamese_loss = -cos_sum / (2.0 * n)                 # 0.5*(loss1+loss2)
                vq_loss = (0.5 * (1.0 + beta) / n_e) * vq_sum
                loss = siamese_loss + w * vq_loss
                return [loss, siamese_loss, vq_loss]

            packed = _fused_losses([cos_fam, vq_fam], finalize, 3)
            loss, siamese_loss, vq_loss = packed[0], packed[1], packed[2]
            return loss, {"siamese_loss": siamese_loss, "vq_loss": vq_loss}

    __call__ = forward


# -------------------------------------------------------- reference (plain JAX) for checks

def _ref_cos(p, z):
    pn = p / jnp.maximum(jnp.linalg.norm(p, axis=1, keepdims=True), _EPS)
    zn = z / jnp.maximum(jnp.linalg.norm(z, axis=1, keepdims=True), _EPS)
    return -jnp.mean(jnp.sum(pn * zn, axis=1))


def _ref_mse(a, b):
    return jnp.mean((a - b) ** 2)


def _ref_forward_no_recon(outs, beta, w):
    l1 = _ref_cos(outs["p1"], outs["z2"])
    l2 = _ref_cos(outs["p2"], outs["z1"])
    cb1 = _ref_mse(outs["embeddings1"], outs["encoded1"])
    cb2 = _ref_mse(outs["embeddings2"], outs["encoded2"])
    siamese = 0.5 * l1 + 0.5 * l2
    vq = 0.5 * (cb1 + cb2 + beta * (cb1 + cb2))
    return siamese + w * vq, siamese, vq


def _ref_forward_recon(outs, beta, w):
    cb1 = _ref_mse(outs["embeddings1"], outs["encoded1"])
    cb2 = _ref_mse(outs["embeddings2"], outs["encoded2"])
    r1 = _ref_mse(outs["im_aug1"], outs["recon1"])
    r2 = _ref_mse(outs["im_aug2"], outs["recon2"])
    recon = 0.5 * r1 + 0.5 * r2
    vq = 0.5 * (cb1 + cb2 + beta * (cb1 + cb2))
    return recon + w * vq, recon, vq


def _make_outs(key, n, d, emb_shape):
    ks = jax.random.split(key, 8)
    return {
        "p1": jax.random.normal(ks[0], (n, d), jnp.float32),
        "p2": jax.random.normal(ks[1], (n, d), jnp.float32),
        "z1": jax.random.normal(ks[2], (n, d), jnp.float32),
        "z2": jax.random.normal(ks[3], (n, d), jnp.float32),
        "indices1": jnp.zeros(emb_shape[:1] + emb_shape[2:], jnp.int32),
        "indices2": jnp.zeros(emb_shape[:1] + emb_shape[2:], jnp.int32),
        "embeddings1": jax.random.normal(ks[4], emb_shape, jnp.float32),
        "embeddings2": jax.random.normal(ks[5], emb_shape, jnp.float32),
        "encoded1": jax.random.normal(ks[6], emb_shape, jnp.float32),
        "encoded2": jax.random.normal(ks[7], emb_shape, jnp.float32),
    }


# --------------------------------------------------------------------------------- main

if __name__ == "__main__":
    key = jax.random.PRNGKey(0)
    k1, k2, k3, k4 = jax.random.split(key, 4)

    beta, w = 0.25, 1.0

    # --- test 1: no-recon branch, small f32 shapes ---------------------------------------
    outs = _make_outs(k1, n=12, d=256, emb_shape=(2, 4, 16, 16))
    crit = SimSiamLoss(SimpleNamespace(beta=beta, vq_loss_weight=w, use_recon=False))
    loss, aux = crit(outs)
    loss = jax.block_until_ready(loss)
    ref, ref_s, ref_v = _ref_forward_no_recon(outs, beta, w)
    assert jnp.allclose(loss, ref, rtol=1e-5, atol=1e-5), (loss, ref)
    assert jnp.allclose(aux["siamese_loss"], ref_s, rtol=1e-5, atol=1e-5)
    assert jnp.allclose(aux["vq_loss"], ref_v, rtol=1e-5, atol=1e-5)

    # --- test 2: recon branch, small shapes ----------------------------------------------
    img_shape = (2, 3, 16, 16)
    ks = jax.random.split(k2, 4)
    outs_r = dict(outs)
    outs_r.update({
        "im_aug1": jax.random.normal(ks[0], img_shape, jnp.float32),
        "im_aug2": jax.random.normal(ks[1], img_shape, jnp.float32),
        "recon1": jax.random.normal(ks[2], img_shape, jnp.float32),
        "recon2": jax.random.normal(ks[3], img_shape, jnp.float32),
    })
    crit_r = SimSiamLoss(SimpleNamespace(beta=beta, vq_loss_weight=w, use_recon=True))
    loss_r, aux_r = crit_r(outs_r)
    loss_r = jax.block_until_ready(loss_r)
    ref_r, ref_rr, ref_rv = _ref_forward_recon(outs_r, beta, w)
    assert jnp.allclose(loss_r, ref_r, rtol=1e-5, atol=1e-5), (loss_r, ref_r)
    assert jnp.allclose(aux_r["siamese_loss"], ref_rr, rtol=1e-5, atol=1e-5)
    assert jnp.allclose(aux_r["vq_loss"], ref_rv, rtol=1e-5, atol=1e-5)
    jax.block_until_ready(aux_r["img1"])

    # --- test 3: force tiny blocks + 2-way core split -> multi-tile grid, block-index
    #     clamping, in-kernel ragged-tail masking, and the non-128 lane-width fallback ----
    _TARGET_BLOCK_BYTES = 4096
    _FORCE_SPLIT = 2
    outs_t = _make_outs(k3, n=20, d=256, emb_shape=(2, 3, 5, 16))   # 480 elems: W=16 path
    loss_t, aux_t = crit(outs_t)
    loss_t = jax.block_until_ready(loss_t)
    ref_t, ref_ts, ref_tv = _ref_forward_no_recon(outs_t, beta, w)
    assert jnp.allclose(loss_t, ref_t, rtol=1e-5, atol=1e-5), (loss_t, ref_t)
    assert jnp.allclose(aux_t["siamese_loss"], ref_ts, rtol=1e-5, atol=1e-5)
    assert jnp.allclose(aux_t["vq_loss"], ref_tv, rtol=1e-5, atol=1e-5)
    _TARGET_BLOCK_BYTES = 3 * 512 * 1024
    _FORCE_SPLIT = None

    # --- test 4: bf16 inputs streamed natively (cast to f32 only inside the kernel) ------
    outs_b = {k: (v.astype(jnp.bfloat16) if v.dtype == jnp.float32 else v)
              for k, v in _make_outs(k4, n=12, d=256, emb_shape=(2, 4, 16, 16)).items()}
    loss_b, aux_b = crit(outs_b)
    loss_b = jax.block_until_ready(loss_b)
    outs_b32 = {k: (v.astype(jnp.float32) if v.dtype == jnp.bfloat16 else v)
                for k, v in outs_b.items()}
    ref_b, ref_bs, ref_bv = _ref_forward_no_recon(outs_b32, beta, w)
    assert jnp.allclose(loss_b, ref_b, rtol=1e-5, atol=1e-5), (loss_b, ref_b)
    assert jnp.allclose(aux_b["siamese_loss"], ref_bs, rtol=1e-5, atol=1e-5)
    assert jnp.allclose(aux_b["vq_loss"], ref_bv, rtol=1e-5, atol=1e-5)

    print("KERNEL_OK")
</pallas_src>

<mosaic_0001>
module attributes {stable_mosaic.version = 11 : i64} {
  func.func @kernel(%arg0: i32, %arg1: i32, %arg2: memref<12x256xf32, #tpu.memory_space<vmem>>, %arg3: memref<12x256xf32, #tpu.memory_space<vmem>>, %arg4: memref<12x256xf32, #tpu.memory_space<vmem>>, %arg5: memref<12x256xf32, #tpu.memory_space<vmem>>, %arg6: memref<16x128xf32, #tpu.memory_space<vmem>>, %arg7: memref<16x128xf32, #tpu.memory_space<vmem>>, %arg8: memref<16x128xf32, #tpu.memory_space<vmem>>, %arg9: memref<16x128xf32, #tpu.memory_space<vmem>>, %arg10: memref<8x128xf32, #tpu.memory_space<vmem>>, %arg11: memref<1x1xf32, #tpu.memory_space<vmem>>, %arg12: memref<1x128xf32, #tpu.memory_space<vmem>>) attributes {dimension_semantics = [#tpu.dimension_semantics<parallel>, #tpu.dimension_semantics<arbitrary>], iteration_bounds = array<i64: 1, 1>, scalar_prefetch = 0 : i64, scratch_operands = 2 : i64, tpu.core_type = #tpu.core_type<tc>, window_params = [{transform_indices = @transform_0, window_bounds = array<i64: 12, 256>}, {transform_indices = @transform_1, window_bounds = array<i64: 12, 256>}, {transform_indices = @transform_2, window_bounds = array<i64: 12, 256>}, {transform_indices = @transform_3, window_bounds = array<i64: 12, 256>}, {transform_indices = @transform_4, window_bounds = array<i64: 16, 128>}, {transform_indices = @transform_5, window_bounds = array<i64: 16, 128>}, {transform_indices = @transform_6, window_bounds = array<i64: 16, 128>}, {transform_indices = @transform_7, window_bounds = array<i64: 16, 128>}, {transform_indices = @transform_8, window_bounds = array<i64: 8, 128>}]} {
    %c0_i32 = arith.constant 0 : i32
    %0 = arith.cmpi eq, %arg1, %c0_i32 : i32
    %1 = arith.extui %0 : i1 to i32
    %c0_i32_0 = arith.constant 0 : i32
    %2 = arith.cmpi ne, %1, %c0_i32_0 : i32
    scf.if %2 {
      %cst_41 = arith.constant 0.000000e+00 : f32
      %77 = vector.broadcast %cst_41 : f32 to vector<1x1xf32>
      %c0_42 = arith.constant 0 : index
      %c0_43 = arith.constant 0 : index
      %78 = vector.load %arg11[%c0_42, %c0_43] : memref<1x1xf32, #tpu.memory_space<vmem>>, vector<1x1xf32>
      tpu.vector_store %arg11[%c0_42, %c0_43], %77 {strides = array<i32>} : memref<1x1xf32, #tpu.memory_space<vmem>>, vector<1x1xf32>,
      %cst_44 = arith.constant 0.000000e+00 : f32
      %79 = vector.broadcast %cst_44 : f32 to vector<1x128xf32>
      %c0_45 = arith.constant 0 : index
      %c0_46 = arith.constant 0 : index
      %80 = vector.load %arg12[%c0_45, %c0_46] : memref<1x128xf32, #tpu.memory_space<vmem>>, vector<1x128xf32>
      tpu.vector_store %arg12[%c0_45, %c0_46], %79 {strides = array<i32>} : memref<1x128xf32, #tpu.memory_space<vmem>>, vector<1x128xf32>,
    } else {
    }
    %c0 = arith.constant 0 : index
    %c0_1 = arith.constant 0 : index
    %3 = vector.load %arg2[%c0, %c0_1] : memref<12x256xf32, #tpu.memory_space<vmem>>, vector<12x256xf32>
    %c0_2 = arith.constant 0 : index
    %c0_3 = arith.constant 0 : index
    %4 = vector.load %arg3[%c0_2, %c0_3] : memref<12x256xf32, #tpu.memory_space<vmem>>, vector<12x256xf32>
    %5 = arith.mulf %3, %4 : vector<12x256xf32>
    %cst = arith.constant dense<0.000000e+00> : vector<12xf32>
    %6 = vector.multi_reduction <add>, %5, %cst [1] : vector<12x256xf32> to vector<12xf32>
    %7 = vector.shape_cast %6 : vector<12xf32> to vector<12x1xf32>
    %8 = arith.mulf %3, %3 : vector<12x256xf32>
    %cst_4 = arith.constant dense<0.000000e+00> : vector<12xf32>
    %9 = vector.multi_reduction <add>, %8, %cst_4 [1] : vector<12x256xf32> to vector<12xf32>
    %10 = vector.shape_cast %9 : vector<12xf32> to vector<12x1xf32>
    %11 = arith.mulf %4, %4 : vector<12x256xf32>
    %cst_5 = arith.constant dense<0.000000e+00> : vector<12xf32>
    %12 = vector.multi_reduction <add>, %11, %cst_5 [1] : vector<12x256xf32> to vector<12xf32>
    %13 = vector.shape_cast %12 : vector<12xf32> to vector<12x1xf32>
    %14 = math.sqrt %10 : vector<12x1xf32>
    %cst_6 = arith.constant 9.99999996E-13 : f32
    %15 = vector.broadcast %cst_6 : f32 to vector<12x1xf32>
    %16 = arith.maximumf %14, %15 : vector<12x1xf32>
    %17 = math.sqrt %13 : vector<12x1xf32>
    %cst_7 = arith.constant 9.99999996E-13 : f32
    %18 = vector.broadcast %cst_7 : f32 to vector<12x1xf32>
    %19 = arith.maximumf %17, %18 : vector<12x1xf32>
    %20 = arith.mulf %16, %19 : vector<12x1xf32>
    %cst_8 = arith.constant 1.000000e+00 : f32
    %21 = vector.broadcast %cst_8 : f32 to vector<12x1xf32>
    %22 = arith.divf %21, %20 : vector<12x1xf32>
    %23 = arith.mulf %7, %22 : vector<12x1xf32>
    %24 = vector.shape_cast %23 : vector<12x1xf32> to vector<1x12x1xf32>
    %cst_9 = arith.constant dense<0.000000e+00> : vector<1xf32>
    %25 = vector.multi_reduction <add>, %24, %cst_9 [1, 2] : vector<1x12x1xf32> to vector<1xf32>
    %26 = vector.shape_cast %25 : vector<1xf32> to vector<1x1x1xf32>
    %27 = vector.extract %26[0, 0, 0] : f32 from vector<1x1x1xf32>
    %c0_10 = arith.constant 0 : index
    %c0_11 = arith.constant 0 : index
    %28 = vector.load %arg4[%c0_10, %c0_11] : memref<12x256xf32, #tpu.memory_space<vmem>>, vector<12x256xf32>
    %c0_12 = arith.constant 0 : index
    %c0_13 = arith.constant 0 : index
    %29 = vector.load %arg5[%c0_12, %c0_13] : memref<12x256xf32, #tpu.memory_space<vmem>>, vector<12x256xf32>
    %30 = arith.mulf %28, %29 : vector<12x256xf32>
    %cst_14 = arith.constant dense<0.000000e+00> : vector<12xf32>
    %31 = vector.multi_reduction <add>, %30, %cst_14 [1] : vector<12x256xf32> to vector<12xf32>
    %32 = vector.shape_cast %31 : vector<12xf32> to vector<12x1xf32>
    %33 = arith.mulf %28, %28 : vector<12x256xf32>
    %cst_15 = arith.constant dense<0.000000e+00> : vector<12xf32>
    %34 = vector.multi_reduction <add>, %33, %cst_15 [1] : vector<12x256xf32> to vector<12xf32>
    %35 = vector.shape_cast %34 : vector<12xf32> to vector<12x1xf32>
    %36 = arith.mulf %29, %29 : vector<12x256xf32>
    %cst_16 = arith.constant dense<0.000000e+00> : vector<12xf32>
    %37 = vector.multi_reduction <add>, %36, %cst_16 [1] : vector<12x256xf32> to vector<12xf32>
    %38 = vector.shape_cast %37 : vector<12xf32> to vector<12x1xf32>
    %39 = math.sqrt %35 : vector<12x1xf32>
    %cst_17 = arith.constant 9.99999996E-13 : f32
    %40 = vector.broadcast %cst_17 : f32 to vector<12x1xf32>
    %41 = arith.maximumf %39, %40 : vector<12x1xf32>
    %42 = math.sqrt %38 : vector<12x1xf32>
    %cst_18 = arith.constant 9.99999996E-13 : f32
    %43 = vector.broadcast %cst_18 : f32 to vector<12x1xf32>
    %44 = arith.maximumf %42, %43 : vector<12x1xf32>
    %45 = arith.mulf %41, %44 : vector<12x1xf32>
    %cst_19 = arith.constant 1.000000e+00 : f32
    %46 = vector.broadcast %cst_19 : f32 to vector<12x1xf32>
    %47 = arith.divf %46, %45 : vector<12x1xf32>
    %48 = arith.mulf %32, %47 : vector<12x1xf32>
    %49 = vector.shape_cast %48 : vector<12x1xf32> to vector<1x12x1xf32>
    %cst_20 = arith.constant dense<0.000000e+00> : vector<1xf32>
    %50 = vector.multi_reduction <add>, %49, %cst_20 [1, 2] : vector<1x12x1xf32> to vector<1xf32>
    %51 = vector.shape_cast %50 : vector<1xf32> to vector<1x1x1xf32>
    %52 = vector.extract %51[0, 0, 0] : f32 from vector<1x1x1xf32>
    %53 = arith.addf %27, %52 : f32
    %c0_21 = arith.constant 0 : index
    %c0_22 = arith.constant 0 : index
    %54 = vector.load %arg11[%c0_21, %c0_22] : memref<1x1xf32, #tpu.memory_space<vmem>>, vector<1x1xf32>
    %55 = vector.broadcast %53 : f32 to vector<1x1xf32>
    %56 = arith.addf %54, %55 : vector<1x1xf32>
    %c0_23 = arith.constant 0 : index
    %c0_24 = arith.constant 0 : index
    %57 = vector.load %arg11[%c0_23, %c0_24] : memref<1x1xf32, #tpu.memory_space<vmem>>, vector<1x1xf32>
    tpu.vector_store %arg11[%c0_23, %c0_24], %56 {strides = array<i32>} : memref<1x1xf32, #tpu.memory_space<vmem>>, vector<1x1xf32>,
    %c0_25 = arith.constant 0 : index
    %c0_26 = arith.constant 0 : index
    %58 = vector.load %arg6[%c0_25, %c0_26] : memref<16x128xf32, #tpu.memory_space<vmem>>, vector<16x128xf32>
    %c0_27 = arith.constant 0 : index
    %c0_28 = arith.constant 0 : index
    %59 = vector.load %arg7[%c0_27, %c0_28] : memref<16x128xf32, #tpu.memory_space<vmem>>, vector<16x128xf32>
    %60 = arith.subf %58, %59 : vector<16x128xf32>
    %61 = arith.mulf %60, %60 : vector<16x128xf32>
    %cst_29 = arith.constant dense<0.000000e+00> : vector<128xf32>
    %62 = vector.multi_reduction <add>, %61, %cst_29 [0] : vector<16x128xf32> to vector<128xf32>
    %63 = vector.shape_cast %62 : vector<128xf32> to vector<1x128xf32>
    %c0_30 = arith.constant 0 : index
    %c0_31 = arith.constant 0 : index
    %64 = vector.load %arg8[%c0_30, %c0_31] : memref<16x128xf32, #tpu.memory_space<vmem>>, vector<16x128xf32>
    %c0_32 = arith.constant 0 : index
    %c0_33 = arith.constant 0 : index
    %65 = vector.load %arg9[%c0_32, %c0_33] : memref<16x128xf32, #tpu.memory_space<vmem>>, vector<16x128xf32>
    %66 = arith.subf %64, %65 : vector<16x128xf32>
    %67 = arith.mulf %66, %66 : vector<16x128xf32>
    %cst_34 = arith.constant dense<0.000000e+00> : vector<128xf32>
    %68 = vector.multi_reduction <add>, %67, %cst_34 [0] : vector<16x128xf32> to vector<128xf32>
    %69 = vector.shape_cast %68 : vector<128xf32> to vector<1x128xf32>
    %70 = arith.addf %63, %69 : vector<1x128xf32>
    %c0_35 = arith.constant 0 : index
    %c0_36 = arith.constant 0 : index
    %71 = vector.load %arg12[%c0_35, %c0_36] : memref<1x128xf32, #tpu.memory_space<vmem>>, vector<1x128xf32>
    %72 = arith.addf %71, %70 : vector<1x128xf32>
    %c0_37 = arith.constant 0 : index
    %c0_38 = arith.constant 0 : index
    %73 = vector.load %arg12[%c0_37, %c0_38] : memref<1x128xf32, #tpu.memory_space<vmem>>, vector<1x128xf32>
    tpu.vector_store %arg12[%c0_37, %c0_38], %72 {strides = array<i32>} : memref<1x128xf32, #tpu.memory_space<vmem>>, vector<1x128xf32>,
    %c0_i32_39 = arith.constant 0 : i32
    %74 = arith.cmpi eq, %arg1, %c0_i32_39 : i32
    %75 = arith.extui %74 : i1 to i32
    %c0_i32_40 = arith.constant 0 : i32
    %76 = arith.cmpi ne, %75, %c0_i32_40 : i32
    scf.if %76 {
      %c0_41 = arith.constant 0 : index
      %c0_42 = arith.constant 0 : index
      %77 = vector.load %arg11[%c0_41, %c0_42] : memref<1x1xf32, #tpu.memory_space<vmem>>, vector<1x1xf32>
      %78 = vector.shape_cast %77 : vector<1x1xf32> to vector<1x1x1xf32>
      %cst_43 = arith.constant dense<0.000000e+00> : vector<1xf32>
      %79 = vector.multi_reduction <add>, %78, %cst_43 [1, 2] : vector<1x1x1xf32> to vector<1xf32>
      %80 = vector.shape_cast %79 : vector<1xf32> to vector<1x1x1xf32>
      %81 = vector.extract %80[0, 0, 0] : f32 from vector<1x1x1xf32>
      %c0_44 = arith.constant 0 : index
      %c0_45 = arith.constant 0 : index
      %82 = vector.load %arg12[%c0_44, %c0_45] : memref<1x128xf32, #tpu.memory_space<vmem>>, vector<1x128xf32>
      %83 = vector.shape_cast %82 : vector<1x128xf32> to vector<1x1x128xf32>
      %cst_46 = arith.constant dense<0.000000e+00> : vector<1xf32>
      %84 = vector.multi_reduction <add>, %83, %cst_46 [1, 2] : vector<1x1x128xf32> to vector<1xf32>
      %85 = vector.shape_cast %84 : vector<1xf32> to vector<1x1x1xf32>
      %86 = vector.extract %85[0, 0, 0] : f32 from vector<1x1x1xf32>
      %cst_47 = arith.constant 0.000000e+00 : f32
      %87 = arith.subf %cst_47, %81 : f32
      %cst_48 = arith.constant 2.400000e+01 : f32
      %88 = arith.divf %87, %cst_48 : f32
      %cst_49 = arith.constant 3.05175781E-4 : f32
      %89 = arith.mulf %cst_49, %86 : f32
      %cst_50 = arith.constant 1.000000e+00 : f32
      %90 = arith.mulf %cst_50, %89 : f32
      %91 = arith.addf %88, %90 : f32
      %92 = tpu.iota {dimensions = array<i32: 0>} : vector<8x128xi32>
      %cst_51 = arith.constant 0.000000e+00 : f32
      %93 = vector.broadcast %cst_51 : f32 to vector<8x128xf32>
      %c0_i32_52 = arith.constant 0 : i32
      %94 = vector.broadcast %c0_i32_52 : i32 to vector<8x128xi32>
      %95 = arith.cmpi eq, %92, %94 : vector<8x128xi32>
      %96 = vector.broadcast %91 : f32 to vector<8x128xf32>
      %97 = arith.select %95, %96, %93 : vector<8x128xi1>, vector<8x128xf32>
      %c1_i32 = arith.constant 1 : i32
      %98 = vector.broadcast %c1_i32 : i32 to vector<8x128xi32>
      %99 = arith.cmpi eq, %92, %98 : vector<8x128xi32>
      %100 = vector.broadcast %88 : f32 to vector<8x128xf32>
      %101 = arith.select %99, %100, %97 : vector<8x128xi1>, vector<8x128xf32>
      %c2_i32 = arith.constant 2 : i32
      %102 = vector.broadcast %c2_i32 : i32 to vector<8x128xi32>
      %103 = arith.cmpi eq, %92, %102 : vector<8x128xi32>
      %104 = vector.broadcast %89 : f32 to vector<8x128xf32>
      %105 = arith.select %103, %104, %101 : vector<8x128xi1>, vector<8x128xf32>
      %c0_53 = arith.constant 0 : index
      %c0_54 = arith.constant 0 : index
      %106 = vector.load %arg10[%c0_53, %c0_54] : memref<8x128xf32, #tpu.memory_space<vmem>>, vector<8x128xf32>
      tpu.vector_store %arg10[%c0_53, %c0_54], %105 {strides = array<i32>} : memref<8x128xf32, #tpu.memory_space<vmem>>, vector<8x128xf32>,
    } else {
    }
    return
  }
  func.func @transform_0(%arg0: i32, %arg1: i32) -> (i32, i32) {
    %c1_i32 = arith.constant 1 : i32
    %0 = arith.muli %arg0, %c1_i32 : i32
    %1 = arith.addi %0, %arg1 : i32
    %c0_i32 = arith.constant 0 : i32
    %2 = arith.minsi %1, %c0_i32 : i32
    %c0_i32_0 = arith.constant 0 : i32
    %c0_i32_1 = arith.constant 0 : i32
    return %2, %c0_i32_0 : i32, i32
  }
  func.func @transform_1(%arg0: i32, %arg1: i32) -> (i32, i32) {
    %c1_i32 = arith.constant 1 : i32
    %0 = arith.muli %arg0, %c1_i32 : i32
    %1 = arith.addi %0, %arg1 : i32
    %c0_i32 = arith.constant 0 : i32
    %2 = arith.minsi %1, %c0_i32 : i32
    %c0_i32_0 = arith.constant 0 : i32
    %c0_i32_1 = arith.constant 0 : i32
    return %2, %c0_i32_0 : i32, i32
  }
  func.func @transform_2(%arg0: i32, %arg1: i32) -> (i32, i32) {
    %c1_i32 = arith.constant 1 : i32
    %0 = arith.muli %arg0, %c1_i32 : i32
    %1 = arith.addi %0, %arg1 : i32
    %c0_i32 = arith.constant 0 : i32
    %2 = arith.minsi %1, %c0_i32 : i32
    %c0_i32_0 = arith.constant 0 : i32
    %c0_i32_1 = arith.constant 0 : i32
    return %2, %c0_i32_0 : i32, i32
  }
  func.func @transform_3(%arg0: i32, %arg1: i32) -> (i32, i32) {
    %c1_i32 = arith.constant 1 : i32
    %0 = arith.muli %arg0, %c1_i32 : i32
    %1 = arith.addi %0, %arg1 : i32
    %c0_i32 = arith.constant 0 : i32
    %2 = arith.minsi %1, %c0_i32 : i32
    %c0_i32_0 = arith.constant 0 : i32
    %c0_i32_1 = arith.constant 0 : i32
    return %2, %c0_i32_0 : i32, i32
  }
  func.func @transform_4(%arg0: i32, %arg1: i32) -> (i32, i32) {
    %c1_i32 = arith.constant 1 : i32
    %0 = arith.muli %arg0, %c1_i32 : i32
    %1 = arith.addi %0, %arg1 : i32
    %c0_i32 = arith.constant 0 : i32
    %2 = arith.minsi %1, %c0_i32 : i32
    %c0_i32_0 = arith.constant 0 : i32
    %c0_i32_1 = arith.constant 0 : i32
    return %2, %c0_i32_0 : i32, i32
  }
  func.func @transform_5(%arg0: i32, %arg1: i32) -> (i32, i32) {
    %c1_i32 = arith.constant 1 : i32
    %0 = arith.muli %arg0, %c1_i32 : i32
    %1 = arith.addi %0, %arg1 : i32
    %c0_i32 = arith.constant 0 : i32
    %2 = arith.minsi %1, %c0_i32 : i32
    %c0_i32_0 = arith.constant 0 : i32
    %c0_i32_1 = arith.constant 0 : i32
    return %2, %c0_i32_0 : i32, i32
  }
  func.func @transform_6(%arg0: i32, %arg1: i32) -> (i32, i32) {
    %c1_i32 = arith.constant 1 : i32
    %0 = arith.muli %arg0, %c1_i32 : i32
    %1 = arith.addi %0, %arg1 : i32
    %c0_i32 = arith.constant 0 : i32
    %2 = arith.minsi %1, %c0_i32 : i32
    %c0_i32_0 = arith.constant 0 : i32
    %c0_i32_1 = arith.constant 0 : i32
    return %2, %c0_i32_0 : i32, i32
  }
  func.func @transform_7(%arg0: i32, %arg1: i32) -> (i32, i32) {
    %c1_i32 = arith.constant 1 : i32
    %0 = arith.muli %arg0, %c1_i32 : i32
    %1 = arith.addi %0, %arg1 : i32
    %c0_i32 = arith.constant 0 : i32
    %2 = arith.minsi %1, %c0_i32 : i32
    %c0_i32_0 = arith.constant 0 : i32
    %c0_i32_1 = arith.constant 0 : i32
    return %2, %c0_i32_0 : i32, i32
  }
  func.func @transform_8(%arg0: i32, %arg1: i32) -> (i32, i32) {
    %c0_i32 = arith.constant 0 : i32
    %c0_i32_0 = arith.constant 0 : i32
    return %arg0, %c0_i32 : i32, i32
  }
}

</mosaic_0001>

<llo_original>
// kernel: tpu_custom_call.1
$region0: #{tpu_custom_call.1}
  #allocation0 [shape = 'u32[]', space=smem, size = 0x4, offset = 0x4, fixed_abs, tag = 'smem constant byte address 0x4 - core index']
  #allocation1 [shape = 'u32[144,128]{1,0:T(1,128)}', space=vmem, size = 0x12000, scoped, tag = 'internal scratch']
  #allocation2 [shape = 'f32[1,1]{1,0:T(1,128)}', space=vmem, size = 0x200, scoped, tag = 'scratch operand']
  #allocation3 [shape = 'f32[1,128]{1,0:T(1,128)}', space=vmem, size = 0x200, scoped, tag = 'scratch operand']
  %s0 = inlined_call_operand.hbm [shape: f32[12,256], index: 0, kind: input, shape index: {}]
  %s1 = inlined_call_operand.hbm [shape: f32[12,256], index: 1, kind: input, shape index: {}]
  %s2 = inlined_call_operand.hbm [shape: f32[12,256], index: 2, kind: input, shape index: {}]
  %s3 = inlined_call_operand.hbm [shape: f32[12,256], index: 3, kind: input, shape index: {}]
  %s4 = inlined_call_operand.hbm [shape: f32[16,128], index: 4, kind: input, shape index: {}]
  %s5 = inlined_call_operand.vmem [shape: f32[16,128], index: 5, kind: input, shape index: {}]
  %s6 = inlined_call_operand.hbm [shape: f32[16,128], index: 6, kind: input, shape index: {}]
  %s7 = inlined_call_operand.hbm [shape: f32[16,128], index: 7, kind: input, shape index: {}]
  %s8 = inlined_call_operand.hbm [shape: f32[8,128], index: 8, kind: output, shape index: {}]
  %s9 = sld [smem:[#allocation0]]
  $region78: #{tpu_custom_call.1} parent=0
    _
  %s11 = ssub.s32 1, %s9
  %s12 = scalar_select 0, %s11, %s9
  $region1: #{tpu_custom_call.1} parent=0
    #allocation4 [shape = 'u8[16384]{0}', space=vmem, size = 0x4000, scoped, tag = 'input window, operand 0, single buffered']
    #allocation5 [shape = 's32[1]{0}', space=sflag, size = 0x4, scoped, tag = 'scoped memory for tpu_custom_call.1']
    #allocation6 [shape = 's32[1]{0}', space=sflag, size = 0x4, scoped, tag = 'scoped memory for tpu_custom_call.1']
    #allocation7 [shape = 'u8[16384]{0}', space=vmem, size = 0x4000, scoped, tag = 'input window, operand 1, single buffered']
    #allocation8 [shape = 's32[1]{0}', space=sflag, size = 0x4, scoped, tag = 'scoped memory for tpu_custom_call.1']
    #allocation9 [shape = 'u8[16384]{0}', space=vmem, size = 0x4000, scoped, tag = 'input window, operand 2, single buffered']
    #allocation10 [shape = 'u8[16384]{0}', space=vmem, size = 0x4000, scoped, tag = 'input window, operand 3, single buffered']
    #allocation11 [shape = 's32[1]{0}', space=sflag, size = 0x4, scoped, tag = 'scoped memory for tpu_custom_call.1']
    #allocation12 [shape = 'u8[8192]{0}', space=vmem, size = 0x2000, scoped, tag = 'input window, operand 4, single buffered']
    #allocation13 [shape = 'u8[8192]{0}', space=vmem, size = 0x2000, scoped, tag = 'input window, operand 6, single buffered']
    #allocation14 [shape = 's32[1]{0}', space=sflag, size = 0x4, scoped, tag = 'scoped memory for tpu_custom_call.1']
    #allocation15 [shape = 'u8[8192]{0}', space=vmem, size = 0x2000, scoped, tag = 'input window, operand 7, single buffered']
    #allocation16 [shape = 'u8[4096]{0}', space=vmem, size = 0x1000, scoped, tag = 'output window, operand 0, single buffered']
    %13 = vsyncpa [#allocation5], 0
    %14 = vsyncpa [#allocation8], 0
    %15 = vsyncpa [#allocation11], 0
    %16 = vsyncpa [#allocation14], 0
    %17 = vsyncpa [#allocation6], 0
    // Predicated region
    $region2: #{tpu_custom_call.1} parent=1 // pred_check
      _
    $region3: #{tpu_custom_call.1} parent=1 // pred_check_branch
      %19 = sbr.rel (0) target = $region5
    $region4: #{tpu_custom_call.1} parent=1 // pred_region
      %s20 = sadd.s32 0, 0
      %p21 = scmp.lt.s32.totalorder %s20, 0
      %s22 = scalar_select %p21, %s20, 0
      %s23 = smul.u32 2, %s22
      %s25 = ssub.s32 512, 512
      %26 = vsyncadd [#allocation5], %s25
      %s27 = smul.addr %s23, 2
      %s28 = smul.addr %s27, 128
      %s29 = scalar_lea.hbm %s0, %s28
      %s30 = sshll.u32 [#allocation4], 4
      %s31 = int_to_ptr.vmem [resolvable:$true] %s30
      %36 = dma.hbm_to_vmem [thread:$0]  %s29, 512, %s31, [#allocation5], 256, 256, 16
    $region5: #{tpu_custom_call.1} parent=1 // pred_fallthru
      _
    // Predicated region
    $region6: #{tpu_custom_call.1} parent=1 // pred_check
      _
    $region7: #{tpu_custom_call.1} parent=1 // pred_check_branch
      %38 = sbr.rel (0) target = $region9
    $region8: #{tpu_custom_call.1} parent=1 // pred_region
      %s39 = sadd.s32 0, 0
      %p40 = scmp.lt.s32.totalorder %s39, 0
      %s41 = scalar_select %p40, %s39, 0
      %s42 = smul.u32 2, %s41
      %s44 = ssub.s32 512, 512
      %45 = vsyncadd [#allocation8], %s44
      %s46 = smul.addr %s42, 2
      %s47 = smul.addr %s46, 128
      %s48 = scalar_lea.hbm %s1, %s47
      %s49 = sshll.u32 [#allocation7], 4
      %s50 = int_to_ptr.vmem [resolvable:$true] %s49
      %55 = dma.hbm_to_vmem [thread:$0]  %s48, 512, %s50, [#allocation8], 256, 256, 16
    $region9: #{tpu_custom_call.1} parent=1 // pred_fallthru
      _
    // Predicated region
    $region10: #{tpu_custom_call.1} parent=1 // pred_check
      _
    $region11: #{tpu_custom_call.1} parent=1 // pred_check_branch
      %57 = sbr.rel (0) target = $region13
    $region12: #{tpu_custom_call.1} parent=1 // pred_region
      %s58 = sadd.s32 0, 0
      %p59 = scmp.lt.s32.totalorder %s58, 0
      %s60 = scalar_select %p59, %s58, 0
      %s61 = smul.u32 2, %s60
      %s63 = ssub.s32 512, 512
      %64 = vsyncadd [#allocation8], %s63
      %s65 = smul.addr %s61, 2
      %s66 = smul.addr %s65, 128
      %s67 = scalar_lea.hbm %s2, %s66
      %s68 = sshll.u32 [#allocation9], 4
      %s69 = int_to_ptr.vmem [resolvable:$true] %s68
      %74 = dma.hbm_to_vmem [thread:$0]  %s67, 512, %s69, [#allocation8], 256, 256, 16
    $region13: #{tpu_custom_call.1} parent=1 // pred_fallthru
      _
    // Predicated region
    $region14: #{tpu_custom_call.1} parent=1 // pred_check
      _
    $region15: #{tpu_custom_call.1} parent=1 // pred_check_branch
      %76 = sbr.rel (0) target = $region17
    $region16: #{tpu_custom_call.1} parent=1 // pred_region
      %s77 = sadd.s32 0, 0
      %p78 = scmp.lt.s32.totalorder %s77, 0
      %s79 = scalar_select %p78, %s77, 0
      %s80 = smul.u32 2, %s79
      %s82 = ssub.s32 512, 512
      %83 = vsyncadd [#allocation11], %s82
      %s84 = smul.addr %s80, 2
      %s85 = smul.addr %s84, 128
      %s86 = scalar_lea.hbm %s3, %s85
      %s87 = sshll.u32 [#allocation10], 4
      %s88 = int_to_ptr.vmem [resolvable:$true] %s87
      %93 = dma.hbm_to_vmem [thread:$0]  %s86, 512, %s88, [#allocation11], 256, 256, 16
    $region17: #{tpu_custom_call.1} parent=1 // pred_fallthru
      _
    // Predicated region
    $region18: #{tpu_custom_call.1} parent=1 // pred_check
      _
    $region19: #{tpu_custom_call.1} parent=1 // pred_check_branch
      %95 = sbr.rel (0) target = $region21
    $region20: #{tpu_custom_call.1} parent=1 // pred_region
      %s96 = sadd.s32 0, 0
      %p97 = scmp.lt.s32.totalorder %s96, 0
      %s98 = scalar_select %p97, %s96, 0
      %s99 = smul.u32 2, %s98
      %s101 = ssub.s32 256, 256
      %102 = vsyncadd [#allocation11], %s101
      %s103 = smul.addr %s99, 128
      %s104 = scalar_lea.hbm %s4, %s103
      %s105 = sshll.u32 [#allocation12], 4
      %s106 = int_to_ptr.vmem [resolvable:$true] %s105
      %111 = dma.hbm_to_vmem [thread:$0]  %s104, 256, %s106, [#allocation11], 128, 128, 8
    $region21: #{tpu_custom_call.1} parent=1 // pred_fallthru
      _
    // Predicated region
    $region22: #{tpu_custom_call.1} parent=1 // pred_check
      _
    $region23: #{tpu_custom_call.1} parent=1 // pred_check_branch
      %113 = sbr.rel (0) target = $region25
    $region24: #{tpu_custom_call.1} parent=1 // pred_region
      %s114 = sadd.s32 0, 0
      %p115 = scmp.lt.s32.totalorder %s114, 0
      %s116 = scalar_select %p115, %s114, 0
      %s117 = smul.u32 2, %s116
      %p118 = scmp.lt.s32.totalorder %s117, 1
      %s119 = scalar_select %p118, %s117, 1
      %s120 = smul.addr %s119, 8
      %s121 = scalar_lea.vmem %s5, %s120
      %s122 = sadd.s32 0, 0
      %p123 = scmp.lt.s32.totalorder %s122, 0
      %s124 = scalar_select %p123, %s122, 0
      %s125 = smul.u32 2, %s124
    $region25: #{tpu_custom_call.1} parent=1 // pred_fallthru
      _
    // Predicated region
    $region26: #{tpu_custom_call.1} parent=1 // pred_check
      _
    $region27: #{tpu_custom_call.1} parent=1 // pred_check_branch
      %127 = sbr.rel (0) target = $region29
    $region28: #{tpu_custom_call.1} parent=1 // pred_region
      %s128 = sadd.s32 0, 0
      %p129 = scmp.lt.s32.totalorder %s128, 0
      %s130 = scalar_select %p129, %s128, 0
      %s131 = smul.u32 2, %s130
      %s133 = ssub.s32 256, 256
      %134 = vsyncadd [#allocation14], %s133
      %s135 = smul.addr %s131, 128
      %s136 = scalar_lea.hbm %s6, %s135
      %s137 = sshll.u32 [#allocation13], 4
      %s138 = int_to_ptr.vmem [resolvable:$true] %s137
      %143 = dma.hbm_to_vmem [thread:$0]  %s136, 256, %s138, [#allocation14], 128, 128, 8
    $region29: #{tpu_custom_call.1} parent=1 // pred_fallthru
      _
    // Predicated region
    $region30: #{tpu_custom_call.1} parent=1 // pred_check
      _
    $region31: #{tpu_custom_call.1} parent=1 // pred_check_branch
      %145 = sbr.rel (0) target = $region33
    $region32: #{tpu_custom_call.1} parent=1 // pred_region
      %s146 = sadd.s32 0, 0
      %p147 = scmp.lt.s32.totalorder %s146, 0
      %s148 = scalar_select %p147, %s146, 0
      %s149 = smul.u32 2, %s148
      %s151 = ssub.s32 256, 256
      %152 = vsyncadd [#allocation14], %s151
      %s153 = smul.addr %s149, 128
      %s154 = scalar_lea.hbm %s7, %s153
      %s155 = sshll.u32 [#allocation15], 4
      %s156 = int_to_ptr.vmem [resolvable:$true] %s155
      %161 = dma.hbm_to_vmem [thread:$0]  %s154, 256, %s156, [#allocation14], 128, 128, 8
    $region33: #{tpu_custom_call.1} parent=1 // pred_fallthru
      _
    // Predicated region
    $region34: #{tpu_custom_call.1} parent=1 // pred_check
      _
    $region35: #{tpu_custom_call.1} parent=1 // pred_check_branch
      %163 = sbr.rel (0) target = $region37
    $region36: #{tpu_custom_call.1} parent=1 // pred_region
      %164 = dma.done [#allocation5], 512
    $region37: #{tpu_custom_call.1} parent=1 // pred_fallthru
      _
    // Predicated region
    $region38: #{tpu_custom_call.1} parent=1 // pred_check
      _
    $region39: #{tpu_custom_call.1} parent=1 // pred_check_branch
      %166 = sbr.rel (0) target = $region41
    $region40: #{tpu_custom_call.1} parent=1 // pred_region
      %167 = dma.done [#allocation8], 512
    $region41: #{tpu_custom_call.1} parent=1 // pred_fallthru
      _
    // Predicated region
    $region42: #{tpu_custom_call.1} parent=1 // pred_check
      _
    $region43: #{tpu_custom_call.1} parent=1 // pred_check_branch
      %169 = sbr.rel (0) target = $region45
    $region44: #{tpu_custom_call.1} parent=1 // pred_region
      %170 = dma.done [#allocation8], 512
    $region45: #{tpu_custom_call.1} parent=1 // pred_fallthru
      _
    // Predicated region
    $region46: #{tpu_custom_call.1} parent=1 // pred_check
      _
    $region47: #{tpu_custom_call.1} parent=1 // pred_check_branch
      %172 = sbr.rel (0) target = $region49
    $region48: #{tpu_custom_call.1} parent=1 // pred_region
      %173 = dma.done [#allocation11], 512
    $region49: #{tpu_custom_call.1} parent=1 // pred_fallthru
      _
    // Predicated region
    $region50: #{tpu_custom_call.1} parent=1 // pred_check
      _
    $region51: #{tpu_custom_call.1} parent=1 // pred_check_branch
      %175 = sbr.rel (0) target = $region53
    $region52: #{tpu_custom_call.1} parent=1 // pred_region
      %176 = dma.done [#allocation11], 256
    $region53: #{tpu_custom_call.1} parent=1 // pred_fallthru
      _
    // Predicated region
    $region54: #{tpu_custom_call.1} parent=1 // pred_check
      _
    $region55: #{tpu_custom_call.1} parent=1 // pred_check_branch
      %178 = sbr.rel (0) target = $region57
    $region56: #{tpu_custom_call.1} parent=1 // pred_region
      %179 = dma.done [#allocation14], 256
    $region57: #{tpu_custom_call.1} parent=1 // pred_fallthru
      _
    // Predicated region
    $region58: #{tpu_custom_call.1} parent=1 // pred_check
      _
    $region59: #{tpu_custom_call.1} parent=1 // pred_check_branch
      %181 = sbr.rel (0) target = $region61
    $region60: #{tpu_custom_call.1} parent=1 // pred_region
      %182 = dma.done [#allocation14], 256
    $region61: #{tpu_custom_call.1} parent=1 // pred_fallthru
      _
    %s183 = sadd.s32 0, 0
    %p184 = scmp.lt.s32.totalorder %s183, 0
    %s185 = scalar_select %p184, %s183, 0
    %s186 = smul.u32 2, %s185
    %p187 = scmp.lt.s32.totalorder %s186, 1
    %s188 = scalar_select %p187, %s186, 1
    %s189 = smul.addr %s188, 8
    %s190 = scalar_lea.vmem %s5, %s189
    %s191 = sadd.s32 0, 0
    %p192 = scmp.lt.s32.totalorder %s191, 0
    %s193 = scalar_select %p192, %s191, 0
    %s194 = smul.u32 2, %s193
    %s195 = sadd.s32 0, 0
    %p196 = scmp.lt.s32.totalorder %s195, 0
    %s197 = scalar_select %p196, %s195, 0
    %s198 = smul.u32 2, %s197
    %s199 = sadd.s32 0, 0
    %p200 = scmp.lt.s32.totalorder %s199, 0
    %s201 = scalar_select %p200, %s199, 0
    %s202 = smul.u32 2, %s201
    %s203 = sadd.s32 0, 0
    %p204 = scmp.lt.s32.totalorder %s203, 0
    %s205 = scalar_select %p204, %s203, 0
    %s206 = smul.u32 2, %s205
    %s207 = sadd.s32 0, 0
    %p208 = scmp.lt.s32.totalorder %s207, 0
    %s209 = scalar_select %p208, %s207, 0
    %s210 = smul.u32 2, %s209
    %s211 = sadd.s32 0, 0
    %p212 = scmp.lt.s32.totalorder %s211, 0
    %s213 = scalar_select %p212, %s211, 0
    %s214 = smul.u32 2, %s213
    %p215 = scmp.lt.s32.totalorder %s214, 1
    %s216 = scalar_select %p215, %s214, 1
    %s217 = smul.addr %s216, 8
    %s218 = scalar_lea.vmem %s5, %s217
    %s219 = sadd.s32 0, 0
    %p220 = scmp.lt.s32.totalorder %s219, 0
    %s221 = scalar_select %p220, %s219, 0
    %s222 = smul.u32 2, %s221
    %s223 = sadd.s32 0, 0
    %p224 = scmp.lt.s32.totalorder %s223, 0
    %s225 = scalar_select %p224, %s223, 0
    %s226 = smul.u32 2, %s225
    %s227 = sadd.s32 0, 0
    %p228 = scmp.lt.s32.totalorder %s227, 0
    %s229 = scalar_select %p228, %s227, 0
    %s230 = smul.u32 2, %s229
    %p231 = scmp.eq.s32.totalorder 0, 0
    // Predicated region
    $region62: #{tpu_custom_call.1} parent=1 // pred_check
      %p232 = pneg %p231
    $region63: #{tpu_custom_call.1} parent=1 // pred_check_branch
      %234 = sbr.rel (%p232) target = $region65
    $region64: #{tpu_custom_call.1} parent=1 // pred_region
      %vm235 = vcmask 0
      %236 = vst.msk [vmem:[#allocation2] sm:$0x1] %vm235, 0.0
      %237 = vst [vmem:[#allocation3] sm:$0x1] 0.0
    $region65: #{tpu_custom_call.1} parent=1 // pred_fallthru
      _
    %v238 = vld [vmem:[#allocation4] sm:$0xff]
    %v239 = vld [vmem:[#allocation4 + $0x8] sm:$0xff]
    %v240 = vld [vmem:[#allocation4 + $0x10] sm:$0xf]
    %v241 = vld [vmem:[#allocation4 + $0x18] sm:$0xf]
    %v242 = vld [vmem:[#allocation7] sm:$0xff]
    %v243 = vld [vmem:[#allocation7 + $0x8] sm:$0xff]
    %v244 = vld [vmem:[#allocation7 + $0x10] sm:$0xf]
    %v245 = vld [vmem:[#allocation7 + $0x18] sm:$0xf]
    %v246 = vmul.f32 %v238, %v242
    %v247 = vmul.f32 %v239, %v243
    %v248 = vmul.f32 %v240, %v244
    %v249 = vmul.f32 %v241, %v245
    %v250 = vadd.f32 %v246, %v247
    %251 = vadd.xlane.f32.xlu0 %v250
    %v252 = vpop.xlane.xlu0 %251
    %vm253 = vcmask 1043456
    %v254 = vsel %vm253, %v248, 0.0
    %v255 = vsel %vm253, %v249, 0.0
    %v256 = vadd.f32 %v254, %v255
    %257 = vadd.xlane.f32.xlu0 %v256
    %v258 = vpop.xlane.xlu0 %257
    %v259 = vmul.f32 %v238, %v238
    %v260 = vmul.f32 %v239, %v239
    %v261 = vmul.f32 %v240, %v240
    %v262 = vmul.f32 %v241, %v241
    %v263 = vadd.f32 %v259, %v260
    %264 = vadd.xlane.f32.xlu0 %v263
    %v265 = vpop.xlane.xlu0 %264
    %v266 = vsel %vm253, %v261, 0.0
    %v267 = vsel %vm253, %v262, 0.0
    %v268 = vadd.f32 %v266, %v267
    %269 = vadd.xlane.f32.xlu0 %v268
    %v270 = vpop.xlane.xlu0 %269
    %v271 = vmul.f32 %v242, %v242
    %v272 = vmul.f32 %v243, %v243
    %v273 = vmul.f32 %v244, %v244
    %v274 = vmul.f32 %v245, %v245
    %v275 = vadd.f32 %v271, %v272
    %276 = vadd.xlane.f32.xlu0 %v275
    %v277 = vpop.xlane.xlu0 %276
    %v278 = vsel %vm253, %v273, 0.0
    %v279 = vsel %vm253, %v274, 0.0
    %v280 = vadd.f32 %v278, %v279
    %281 = vadd.xlane.f32.xlu0 %v280
    %v282 = vpop.xlane.xlu0 %281
    %v283 = vrsqrt.pop %v265
    %v284 = vmul.f32 %v265, %v283
    %vm285 = vcmp.eq.f32.partialorder %v265, inf
    %v286 = vsel %vm285, %v265, %v284
    %vm287 = vcmp.eq.f32.partialorder %v265, 0.0
    %v288 = vand.u32 %v265, 2147483648
    %v289 = vsel %vm287, %v288, %v286
    %v290 = vrsqrt.pop %v270
    %v291 = vmul.f32 %v270, %v290
    %vm292 = vcmp.eq.f32.partialorder %v270, inf
    %v293 = vsel %vm292, %v270, %v291
    %vm294 = vcmp.eq.f32.partialorder %v270, 0.0
    %v295 = vand.u32 %v270, 2147483648
    %v296 = vsel %vm294, %v295, %v293
    %v297 = vmax.f32 %v289, 1e-12
    %v298 = vmax.f32 %v296, 1e-12
    %v299 = vrsqrt.pop %v277
    %v300 = vmul.f32 %v277, %v299
    %vm301 = vcmp.eq.f32.partialorder %v277, inf
    %v302 = vsel %vm301, %v277, %v300
    %vm303 = vcmp.eq.f32.partialorder %v277, 0.0
    %v304 = vand.u32 %v277, 2147483648
    %v305 = vsel %vm303, %v304, %v302
    %v306 = vrsqrt.pop %v282
    %v307 = vmul.f32 %v282, %v306
    %vm308 = vcmp.eq.f32.partialorder %v282, inf
    %v309 = vsel %vm308, %v282, %v307
    %vm310 = vcmp.eq.f32.partialorder %v282, 0.0
    %v311 = vand.u32 %v282, 2147483648
    %v312 = vsel %vm310, %v311, %v309
    %v313 = vmax.f32 %v305, 1e-12
    %v314 = vmax.f32 %v312, 1e-12
    %v315 = vmul.f32 %v297, %v313
    %v316 = vmul.f32 %v298, %v314
    %v317 = vrcp.pop %v315
    %v318 = vmul.f32 1.0, %v317
    %v319 = vrcp.pop %v316
    %v320 = vmul.f32 1.0, %v319
    %v321 = vmul.f32 %v252, %v318
    %v322 = vmul.f32 %v258, %v320
    %vm323 = vcmask 7168
    %v324 = vsel %vm323, %v321, 0.0
    %vm325 = vcmask 3072
    %v326 = vsel %vm325, %v322, 0.0
    %v327 = vadd.f32 %v324, %v326
    %328 = vadd.xlane.f32.xlu0 %v327
    %v329 = vpop.xlane.xlu0 %328
    %v330 = vrot.slane %v329, 4
    %v331 = vadd.f32 %v329, %v330
    %v332 = vrot.slane %v331, 2
    %v333 = vadd.f32 %v331, %v332
    %v334 = vrot.slane %v333, 1
    %v335 = vadd.f32 %v333, %v334
    %s336 = vtos %v335
    %v337 = vld [vmem:[#allocation9] sm:$0xff]
    %v338 = vld [vmem:[#allocation9 + $0x8] sm:$0xff]
    %v339 = vld [vmem:[#allocation9 + $0x10] sm:$0xf]
    %v340 = vld [vmem:[#allocation9 + $0x18] sm:$0xf]
    %v341 = vld [vmem:[#allocation10] sm:$0xff]
    %v342 = vld [vmem:[#allocation10 + $0x8] sm:$0xff]
    %v343 = vld [vmem:[#allocation10 + $0x10] sm:$0xf]
    %v344 = vld [vmem:[#allocation10 + $0x18] sm:$0xf]
    %v345 = vmul.f32 %v337, %v341
    %v346 = vmul.f32 %v338, %v342
    %v347 = vmul.f32 %v339, %v343
    %v348 = vmul.f32 %v340, %v344
    %v349 = vadd.f32 %v345, %v346
    %350 = vadd.xlane.f32.xlu0 %v349
    %v351 = vpop.xlane.xlu0 %350
    %v352 = vsel %vm253, %v347, 0.0
    %v353 = vsel %vm253, %v348, 0.0
    %v354 = vadd.f32 %v352, %v353
    %355 = vadd.xlane.f32.xlu0 %v354
    %v356 = vpop.xlane.xlu0 %355
    %v357 = vmul.f32 %v337, %v337
    %v358 = vmul.f32 %v338, %v338
    %v359 = vmul.f32 %v339, %v339
    %v360 = vmul.f32 %v340, %v340
    %v361 = vadd.f32 %v357, %v358
    %362 = vadd.xlane.f32.xlu0 %v361
    %v363 = vpop.xlane.xlu0 %362
    %v364 = vsel %vm253, %v359, 0.0
    %v365 = vsel %vm253, %v360, 0.0
    %v366 = vadd.f32 %v364, %v365
    %367 = vadd.xlane.f32.xlu0 %v366
    %v368 = vpop.xlane.xlu0 %367
    %v369 = vmul.f32 %v341, %v341
    %v370 = vmul.f32 %v342, %v342
    %v371 = vmul.f32 %v343, %v343
    %v372 = vmul.f32 %v344, %v344
    %v373 = vadd.f32 %v369, %v370
    %374 = vadd.xlane.f32.xlu0 %v373
    %v375 = vpop.xlane.xlu0 %374
    %v376 = vsel %vm253, %v371, 0.0
    %v377 = vsel %vm253, %v372, 0.0
    %v378 = vadd.f32 %v376, %v377
    %379 = vadd.xlane.f32.xlu0 %v378
    %v380 = vpop.xlane.xlu0 %379
    %v381 = vrsqrt.pop %v363
    %v382 = vmul.f32 %v363, %v381
    %vm383 = vcmp.eq.f32.partialorder %v363, inf
    %v384 = vsel %vm383, %v363, %v382
    %vm385 = vcmp.eq.f32.partialorder %v363, 0.0
    %v386 = vand.u32 %v363, 2147483648
    %v387 = vsel %vm385, %v386, %v384
    %v388 = vrsqrt.pop %v368
    %v389 = vmul.f32 %v368, %v388
    %vm390 = vcmp.eq.f32.partialorder %v368, inf
    %v391 = vsel %vm390, %v368, %v389
    %vm392 = vcmp.eq.f32.partialorder %v368, 0.0
    %v393 = vand.u32 %v368, 2147483648
    %v394 = vsel %vm392, %v393, %v391
    %v395 = vmax.f32 %v387, 1e-12
    %v396 = vmax.f32 %v394, 1e-12
    %v397 = vrsqrt.pop %v375
    %v398 = vmul.f32 %v375, %v397
    %vm399 = vcmp.eq.f32.partialorder %v375, inf
    %v400 = vsel %vm399, %v375, %v398
    %vm401 = vcmp.eq.f32.partialorder %v375, 0.0
    %v402 = vand.u32 %v375, 2147483648
    %v403 = vsel %vm401, %v402, %v400
    %v404 = vrsqrt.pop %v380
    %v405 = vmul.f32 %v380, %v404
    %vm406 = vcmp.eq.f32.partialorder %v380, inf
    %v407 = vsel %vm406, %v380, %v405
    %vm408 = vcmp.eq.f32.partialorder %v380, 0.0
    %v409 = vand.u32 %v380, 2147483648
    %v410 = vsel %vm408, %v409, %v407
    %v411 = vmax.f32 %v403, 1e-12
    %v412 = vmax.f32 %v410, 1e-12
    %v413 = vmul.f32 %v395, %v411
    %v414 = vmul.f32 %v396, %v412
    %v415 = vrcp.pop %v413
    %v416 = vmul.f32 1.0, %v415
    %v417 = vrcp.pop %v414
    %v418 = vmul.f32 1.0, %v417
    %v419 = vmul.f32 %v351, %v416
    %v420 = vmul.f32 %v356, %v418
    %v421 = vsel %vm323, %v419, 0.0
    %v422 = vsel %vm325, %v420, 0.0
    %v423 = vadd.f32 %v421, %v422
    %424 = vadd.xlane.f32.xlu0 %v423
    %v425 = vpop.xlane.xlu0 %424
    %v426 = vrot.slane %v425, 4
    %v427 = vadd.f32 %v425, %v426
    %v428 = vrot.slane %v427, 2
    %v429 = vadd.f32 %v427, %v428
    %v430 = vrot.slane %v429, 1
    %v431 = vadd.f32 %v429, %v430
    %s432 = vtos %v431
    %s433 = sadd.f32 %s336, %s432
    %v434 = vld [vmem:[#allocation2] sm:$0x1]
    %v435 = vstv %s433
    %v436 = vadd.f32 %v434, %v435
    %vm437 = vcmask 0
    %438 = vst.msk [vmem:[#allocation2] sm:$0x1] %vm437, %v436
    %v439 = vld [vmem:[#allocation12] sm:$0xff]
    %v440 = vld [vmem:[#allocation12 + $0x8] sm:$0xff]
    %v441 = vld [vmem:[%s218] sm:$0xff]
    %v442 = vld [vmem:[%s218 + $0x8] sm:$0xff]
    %v443 = vsub.f32 %v439, %v441
    %v444 = vsub.f32 %v440, %v442
    %v445 = vmul.f32 %v443, %v443
    %v446 = vmul.f32 %v444, %v444
    %v447 = vadd.f32 %v445, %v446
    %v448 = vrot.slane %v447, 4
    %v449 = vadd.f32 %v447, %v448
    %v450 = vrot.slane %v449, 2
    %v451 = vadd.f32 %v449, %v450
    %v452 = vrot.slane %v451, 1
    %v453 = vadd.f32 %v451, %v452
    %v454 = vld [vmem:[#allocation13] sm:$0xff]
    %v455 = vld [vmem:[#allocation13 + $0x8] sm:$0xff]
    %v456 = vld [vmem:[#allocation15] sm:$0xff]
    %v457 = vld [vmem:[#allocation15 + $0x8] sm:$0xff]
    %v458 = vsub.f32 %v454, %v456
    %v459 = vsub.f32 %v455, %v457
    %v460 = vmul.f32 %v458, %v458
    %v461 = vmul.f32 %v459, %v459
    %v462 = vadd.f32 %v460, %v461
    %v463 = vrot.slane %v462, 4
    %v464 = vadd.f32 %v462, %v463
    %v465 = vrot.slane %v464, 2
    %v466 = vadd.f32 %v464, %v465
    %v467 = vrot.slane %v466, 1
    %v468 = vadd.f32 %v466, %v467
    %v469 = vadd.f32 %v453, %v468
    %v470 = vld [vmem:[#allocation3] sm:$0x1]
    %v471 = vadd.f32 %v470, %v469
    %472 = vst [vmem:[#allocation3] sm:$0x1] %v471
    // Predicated region
    $region66: #{tpu_custom_call.1} parent=1 // pred_check
      %p473 = pneg %p231
    $region67: #{tpu_custom_call.1} parent=1 // pred_check_branch
      %475 = sbr.rel (%p473) target = $region69
    $region68: #{tpu_custom_call.1} parent=1 // pred_region
      %v476 = vld [vmem:[#allocation2] sm:$0x1]
      %v477 = vadd.f32 %v476, 0.0
      %s478 = vtos %v477
      %v479 = vld [vmem:[#allocation3] sm:$0x1]
      %vm480 = vcmask 1040384
      %v481 = vsel %vm480, %v479, 0.0
      %482 = vadd.xlane.f32.xlu0 %v481
      %v483 = vpop.xlane.xlu0 %482
      %v484 = vrot.slane %v483, 4
      %v485 = vadd.f32 %v483, %v484
      %v486 = vrot.slane %v485, 2
      %v487 = vadd.f32 %v485, %v486
      %v488 = vrot.slane %v487, 1
      %v489 = vadd.f32 %v487, %v488
      %s490 = vtos %v489
      %s491 = ssub.f32 0.0, %s478
      %v492 = vrcp.pop 24.0
      %s493 = vtos %v492
      %s494 = smul.f32 %s491, %s493
      %s495 = smul.f32 %s490, 0.00030517578
      %s496 = sadd.f32 %s494, %s495
      %v497 = vlaneseq
      %v498 = vshrl.u32 %v497, 7
      %vm499 = vcmp.eq.s32.totalorder %v498, 0
      %v500 = vstv %s496
      %v501 = vsel %vm499, %v500, 0.0
      %vm502 = vcmp.eq.s32.totalorder %v498, 1
      %v503 = vstv %s494
      %v504 = vsel %vm502, %v503, %v501
      %vm505 = vcmp.eq.s32.totalorder %v498, 2
      %v506 = vstv %s495
      %v507 = vsel %vm505, %v506, %v504
      %508 = vst [vmem:[#allocation16] sm:$0xff] %v507
    $region69: #{tpu_custom_call.1} parent=1 // pred_fallthru
      _
    // Predicated region
    $region70: #{tpu_custom_call.1} parent=1 // pred_check
      _
    $region71: #{tpu_custom_call.1} parent=1 // pred_check_branch
      %510 = sbr.rel (0) target = $region73
    $region72: #{tpu_custom_call.1} parent=1 // pred_region
      %s512 = ssub.s32 128, 128
      %513 = vsyncadd [#allocation6], %s512
      %s515 = sshll.u32 [#allocation16], 4
      %s516 = int_to_ptr.vmem [resolvable:$true] %s515
      %518 = dma.vmem_to_hbm [thread:$0]  %s516, 128, %s8, [#allocation6]
    $region73: #{tpu_custom_call.1} parent=1 // pred_fallthru
      _
    // Predicated region
    $region74: #{tpu_custom_call.1} parent=1 // pred_check
      _
    $region75: #{tpu_custom_call.1} parent=1 // pred_check_branch
      %520 = sbr.rel (0) target = $region77
    $region76: #{tpu_custom_call.1} parent=1 // pred_region
      %521 = dma.done [#allocation6], 128
    $region77: #{tpu_custom_call.1} parent=1 // pred_fallthru
      _
    %522 = vsyncpa [#allocation5], 1
    %523 = vsyncpa [#allocation8], 1
    %524 = vsyncpa [#allocation11], 1
    %525 = vsyncpa [#allocation14], 1
    %526 = vsyncpa [#allocation6], 1

</llo_original>
